<compile_context>
chip_gen: v7x
topology: tpu7x:2x2x1
jax: 0.10.0
libtpu: 0.0.40
codegen_flags: <defaults>
</compile_context>

<pallas_src>
import math

import jax
import jax.numpy as jnp
from jax.experimental import pallas as pl
from jax.experimental.pallas import tpu as pltpu


def _round_up(x, m):
    return ((x + m - 1) // m) * m


def _make_attention_pass_kernel(n_in, matmul_dtype):
    """Kernel factory.  One grid step handles `tile` rows of (batch*seq).

    refs (in order):
      x_0..x_{n_in-1} : (tile, d)  previous-layer outputs (keys/values source)
      kq              : (1, d)     fused, pre-scaled query/key vector
      wvo             : (d, d)     fused value+output projection (matmul dtype)
      bvo             : (1, d)     fused bias (f32)
      o               : (tile, d)  attention output
    """

    def kernel(*refs):
        x_refs = refs[:n_in]
        kq_ref, wvo_ref, bvo_ref, o_ref = refs[n_in:n_in + 4]

        kq = kq_ref[...].astype(jnp.float32)                        # (1, d)

        xs = [x_refs[n][...].astype(jnp.float32) for n in range(n_in)]

        # Per-layer score of the (fused) learned query: VPU mul + lane reduce.
        scores = [jnp.sum(x * kq, axis=-1, keepdims=True) for x in xs]  # (T,1)

        # Softmax over the n_in stacked-layer axis (tiny, fully unrolled).
        m = scores[0]
        for s in scores[1:]:
            m = jnp.maximum(m, s)
        exps = [jnp.exp(s - m) for s in scores]
        denom = exps[0]
        for e in exps[1:]:
            denom = denom + e
        inv = pl.reciprocal(denom, approx=True)                     # EUP slot

        # Attention-weighted mix of the raw layer outputs.  (V/O projections
        # are folded into wvo in the wrapper; exact because weights sum to 1.)
        mix = (exps[0] * inv) * xs[0]
        for n in range(1, n_in):
            mix = mix + (exps[n] * inv) * xs[n]                     # (T, d)

        # Single large MXU matmul: bf16 operands, f32 accumulation.
        y = jnp.dot(mix.astype(matmul_dtype), wvo_ref[...],
                    preferred_element_type=jnp.float32)
        y = y + bvo_ref[...].astype(jnp.float32)
        o_ref[...] = y.astype(o_ref.dtype)

    return kernel


def _pick_tile(requested, BS, d, n_in, x_itemsize, wvo_itemsize,
               budget_bytes=48 * 1024 * 1024):
    """Largest multiple-of-8 row tile <= requested whose double-buffered
    working set fits the VMEM budget."""
    tile = max(8, min(_round_up(requested, 8), _round_up(BS, 8)))

    def est(t):
        return (2 * n_in * t * d * x_itemsize       # double-buffered inputs
                + 2 * t * d * 4                     # double-buffered f32 out
                + d * d * wvo_itemsize              # fused weight
                + 4 * d * 4)                        # kq / bvo vectors
    while tile > 8 and est(tile) > budget_bytes:
        tile = max(8, _round_up(tile // 2, 8))
    return tile, est(tile)


def attention_pass(prev_outputs, params, *, tile=512,
                   matmul_dtype=jnp.bfloat16):
    """prev_outputs: list of n_in arrays of shape (batch, seq, d_model)."""
    n_in = len(prev_outputs)
    B, S, d = prev_outputs[0].shape
    BS = B * S

    (q, wq, wk, wv, wo, bq, bk, bv, bo) = params

    # ---- grid-invariant precompute (runs once, outside the kernel) --------
    qp = q @ wq + bq                                   # (1, d) projected query
    # score_n = (x_n Wk + bk) · qp / sqrt(d) = x_n · kq + const (const cancels)
    kq = ((qp @ wk.T) * (1.0 / math.sqrt(d))).astype(jnp.float32)   # (1, d)
    # ctx = sum_n attn_n (x_n Wv + bv);  y = ctx Wo + bo
    #     = (sum_n attn_n x_n) (Wv Wo) + (bv Wo + bo)
    wvo = (wv @ wo).astype(matmul_dtype)               # (d, d)
    bvo = (bv @ wo + bo).astype(jnp.float32)           # (1, d)

    # ---- tiling ------------------------------------------------------------
    x_itemsize = jnp.dtype(prev_outputs[0].dtype).itemsize
    wvo_itemsize = jnp.dtype(matmul_dtype).itemsize
    tile, est = _pick_tile(tile, BS, d, n_in, x_itemsize, wvo_itemsize)

    BS_pad = _round_up(BS, tile)
    grid = (BS_pad // tile,)

    xs = []
    for x in prev_outputs:
        xf = x.reshape(BS, d)                          # free reshape, no copy
        if BS_pad != BS:
            xf = jnp.pad(xf, ((0, BS_pad - BS), (0, 0)))
        xs.append(xf)

    x_spec = pl.BlockSpec((tile, d), lambda i: (i, 0))
    in_specs = [x_spec] * n_in + [
        pl.BlockSpec((1, d), lambda i: (0, 0)),        # kq
        pl.BlockSpec((d, d), lambda i: (0, 0)),        # Wvo
        pl.BlockSpec((1, d), lambda i: (0, 0)),        # bvo
    ]

    # VMEM limit: 1.5x the working-set estimate, floored at 16 MiB, capped at
    # 64 MiB so the same configuration also fits v7x.
    vmem_limit = int(min(64 * 1024 * 1024,
                         max(int(1.5 * est), 16 * 1024 * 1024)))

    out = pl.pallas_call(
        _make_attention_pass_kernel(n_in, matmul_dtype),
        out_shape=jax.ShapeDtypeStruct((BS_pad, d), jnp.float32),
        grid_spec=pltpu.PrefetchScalarGridSpec(
            num_scalar_prefetch=0,
            grid=grid,
            in_specs=in_specs,
            out_specs=pl.BlockSpec((tile, d), lambda i: (i, 0)),
        ),
        compiler_params=pltpu.CompilerParams(
            dimension_semantics=("parallel",),
            vmem_limit_bytes=vmem_limit),
    )(*xs, kq, wvo, bvo)

    return out[:BS].reshape(B, S, d)


def _reference(prev_outputs, params):
    """Pure-JAX f32 reference of the unfused semantics."""
    (q, wq, wk, wv, wo, bq, bk, bv, bo) = params
    x = jnp.stack(prev_outputs, axis=2)                # (B, S, n_in, d)
    B, S, n_in, d = x.shape
    xf = x.reshape(B * S, n_in, d)
    qp = q @ wq + bq                                   # (1, d)
    k = jnp.einsum('tnd,de->tne', xf, wk) + bk
    v = jnp.einsum('tnd,de->tne', xf, wv) + bv
    scores = jnp.einsum('tne,e->tn', k, qp[0]) / math.sqrt(d)
    attn = jax.nn.softmax(scores, axis=-1)
    ctx = jnp.einsum('tn,tnd->td', attn, v)
    y = ctx @ wo + bo
    return y.reshape(B, S, d)


def init_params(key, d_model):
    ks = jax.random.split(key, 9)
    s = 1.0 / math.sqrt(d_model)
    q  = jax.random.normal(ks[0], (1, d_model), jnp.float32) * s   # learned_queries
    wq = jax.random.normal(ks[1], (d_model, d_model), jnp.float32) * s
    wk = jax.random.normal(ks[2], (d_model, d_model), jnp.float32) * s
    wv = jax.random.normal(ks[3], (d_model, d_model), jnp.float32) * s
    wo = jax.random.normal(ks[4], (d_model, d_model), jnp.float32) * s
    bq = jax.random.normal(ks[5], (1, d_model), jnp.float32) * 0.01
    bk = jax.random.normal(ks[6], (1, d_model), jnp.float32) * 0.01
    bv = jax.random.normal(ks[7], (1, d_model), jnp.float32) * 0.01
    bo = jax.random.normal(ks[8], (1, d_model), jnp.float32) * 0.01
    return (q, wq, wk, wv, wo, bq, bk, bv, bo)


if __name__ == "__main__":
    batch, seq, d_model, n_in = 2, 8, 32, 4

    key = jax.random.PRNGKey(0)
    pkey, xkey = jax.random.split(key)
    params = init_params(pkey, d_model)

    xkeys = jax.random.split(xkey, n_in)
    prev_outputs = [
        jax.random.normal(xkeys[i], (batch, seq, d_model), jnp.float32)
        for i in range(n_in)
    ]

    out = attention_pass(prev_outputs, params)
    out = jax.block_until_ready(out)

    ref = _reference(prev_outputs, params)
    assert out.shape == (batch, seq, d_model)
    # Tolerance accounts for the bf16-operand output-projection matmul.
    assert jnp.allclose(out, ref, atol=2e-2, rtol=2e-2), "mismatch vs reference"

    print("KERNEL_OK")
</pallas_src>

<mosaic_0001>
module attributes {stable_mosaic.version = 11 : i64} {
  func.func @kernel(%arg0: i32, %arg1: memref<16x32xf32, #tpu.memory_space<vmem>>, %arg2: memref<16x32xf32, #tpu.memory_space<vmem>>, %arg3: memref<16x32xf32, #tpu.memory_space<vmem>>, %arg4: memref<16x32xf32, #tpu.memory_space<vmem>>, %arg5: memref<1x32xf32, #tpu.memory_space<vmem>>, %arg6: memref<32x32xbf16, #tpu.memory_space<vmem>>, %arg7: memref<1x32xf32, #tpu.memory_space<vmem>>, %arg8: memref<16x32xf32, #tpu.memory_space<vmem>>) attributes {dimension_semantics = [#tpu.dimension_semantics<parallel>], iteration_bounds = array<i64: 1>, scalar_prefetch = 0 : i64, scratch_operands = 0 : i64, tpu.core_type = #tpu.core_type<tc>, window_params = [{transform_indices = @transform_0, window_bounds = array<i64: 16, 32>}, {transform_indices = @transform_1, window_bounds = array<i64: 16, 32>}, {transform_indices = @transform_2, window_bounds = array<i64: 16, 32>}, {transform_indices = @transform_3, window_bounds = array<i64: 16, 32>}, {pipeline_mode = #tpu.pipeline_mode<synchronous>, transform_indices = @transform_4, window_bounds = array<i64: 1, 32>}, {pipeline_mode = #tpu.pipeline_mode<synchronous>, transform_indices = @transform_5, window_bounds = array<i64: 32, 32>}, {pipeline_mode = #tpu.pipeline_mode<synchronous>, transform_indices = @transform_6, window_bounds = array<i64: 1, 32>}, {transform_indices = @transform_7, window_bounds = array<i64: 16, 32>}]} {
    %c0 = arith.constant 0 : index
    %c0_0 = arith.constant 0 : index
    %0 = vector.load %arg5[%c0, %c0_0] : memref<1x32xf32, #tpu.memory_space<vmem>>, vector<1x32xf32>
    %c0_1 = arith.constant 0 : index
    %c0_2 = arith.constant 0 : index
    %1 = vector.load %arg1[%c0_1, %c0_2] : memref<16x32xf32, #tpu.memory_space<vmem>>, vector<16x32xf32>
    %c0_3 = arith.constant 0 : index
    %c0_4 = arith.constant 0 : index
    %2 = vector.load %arg2[%c0_3, %c0_4] : memref<16x32xf32, #tpu.memory_space<vmem>>, vector<16x32xf32>
    %c0_5 = arith.constant 0 : index
    %c0_6 = arith.constant 0 : index
    %3 = vector.load %arg3[%c0_5, %c0_6] : memref<16x32xf32, #tpu.memory_space<vmem>>, vector<16x32xf32>
    %c0_7 = arith.constant 0 : index
    %c0_8 = arith.constant 0 : index
    %4 = vector.load %arg4[%c0_7, %c0_8] : memref<16x32xf32, #tpu.memory_space<vmem>>, vector<16x32xf32>
    %5 = vector.broadcast %0 : vector<1x32xf32> to vector<16x32xf32>
    %6 = arith.mulf %1, %5 : vector<16x32xf32>
    %cst = arith.constant dense<0.000000e+00> : vector<16xf32>
    %7 = vector.multi_reduction <add>, %6, %cst [1] : vector<16x32xf32> to vector<16xf32>
    %8 = vector.shape_cast %7 : vector<16xf32> to vector<16x1xf32>
    %9 = vector.broadcast %0 : vector<1x32xf32> to vector<16x32xf32>
    %10 = arith.mulf %2, %9 : vector<16x32xf32>
    %cst_9 = arith.constant dense<0.000000e+00> : vector<16xf32>
    %11 = vector.multi_reduction <add>, %10, %cst_9 [1] : vector<16x32xf32> to vector<16xf32>
    %12 = vector.shape_cast %11 : vector<16xf32> to vector<16x1xf32>
    %13 = vector.broadcast %0 : vector<1x32xf32> to vector<16x32xf32>
    %14 = arith.mulf %3, %13 : vector<16x32xf32>
    %cst_10 = arith.constant dense<0.000000e+00> : vector<16xf32>
    %15 = vector.multi_reduction <add>, %14, %cst_10 [1] : vector<16x32xf32> to vector<16xf32>
    %16 = vector.shape_cast %15 : vector<16xf32> to vector<16x1xf32>
    %17 = vector.broadcast %0 : vector<1x32xf32> to vector<16x32xf32>
    %18 = arith.mulf %4, %17 : vector<16x32xf32>
    %cst_11 = arith.constant dense<0.000000e+00> : vector<16xf32>
    %19 = vector.multi_reduction <add>, %18, %cst_11 [1] : vector<16x32xf32> to vector<16xf32>
    %20 = vector.shape_cast %19 : vector<16xf32> to vector<16x1xf32>
    %21 = arith.maximumf %8, %12 : vector<16x1xf32>
    %22 = arith.maximumf %21, %16 : vector<16x1xf32>
    %23 = arith.maximumf %22, %20 : vector<16x1xf32>
    %24 = arith.subf %8, %23 : vector<16x1xf32>
    %25 = math.exp %24 : vector<16x1xf32>
    %26 = arith.subf %12, %23 : vector<16x1xf32>
    %27 = math.exp %26 : vector<16x1xf32>
    %28 = arith.subf %16, %23 : vector<16x1xf32>
    %29 = math.exp %28 : vector<16x1xf32>
    %30 = arith.subf %20, %23 : vector<16x1xf32>
    %31 = math.exp %30 : vector<16x1xf32>
    %32 = arith.addf %25, %27 : vector<16x1xf32>
    %33 = arith.addf %32, %29 : vector<16x1xf32>
    %34 = arith.addf %33, %31 : vector<16x1xf32>
    %35 = tpu.reciprocal %34 {approx = true} : vector<16x1xf32> -> vector<16x1xf32>
    %36 = arith.mulf %25, %35 : vector<16x1xf32>
    %37 = vector.broadcast %36 : vector<16x1xf32> to vector<16x32xf32>
    %38 = arith.mulf %37, %1 : vector<16x32xf32>
    %39 = arith.mulf %27, %35 : vector<16x1xf32>
    %40 = vector.broadcast %39 : vector<16x1xf32> to vector<16x32xf32>
    %41 = arith.mulf %40, %2 : vector<16x32xf32>
    %42 = arith.addf %38, %41 : vector<16x32xf32>
    %43 = arith.mulf %29, %35 : vector<16x1xf32>
    %44 = vector.broadcast %43 : vector<16x1xf32> to vector<16x32xf32>
    %45 = arith.mulf %44, %3 : vector<16x32xf32>
    %46 = arith.addf %42, %45 : vector<16x32xf32>
    %47 = arith.mulf %31, %35 : vector<16x1xf32>
    %48 = vector.broadcast %47 : vector<16x1xf32> to vector<16x32xf32>
    %49 = arith.mulf %48, %4 : vector<16x32xf32>
    %50 = arith.addf %46, %49 : vector<16x32xf32>
    %51 = arith.truncf %50 : vector<16x32xf32> to vector<16x32xbf16>
    %c0_12 = arith.constant 0 : index
    %c0_13 = arith.constant 0 : index
    %52 = vector.load %arg6[%c0_12, %c0_13] : memref<32x32xbf16, #tpu.memory_space<vmem>>, vector<32x32xbf16>
    %cst_14 = arith.constant dense<0.000000e+00> : vector<16x32xf32>
    %53 = tpu.matmul %51, %52, %cst_14 {dimension_numbers = #tpu.dot_dimension_numbers<[1], [0], [0], [1], [0, 0, 1, 1], [], []>} : vector<16x32xbf16>, vector<32x32xbf16>, vector<16x32xf32> -> vector<16x32xf32>
    %c0_15 = arith.constant 0 : index
    %c0_16 = arith.constant 0 : index
    %54 = vector.load %arg7[%c0_15, %c0_16] : memref<1x32xf32, #tpu.memory_space<vmem>>, vector<1x32xf32>
    %55 = vector.broadcast %54 : vector<1x32xf32> to vector<16x32xf32>
    %56 = arith.addf %53, %55 : vector<16x32xf32>
    %c0_17 = arith.constant 0 : index
    %c0_18 = arith.constant 0 : index
    %57 = vector.load %arg8[%c0_17, %c0_18] : memref<16x32xf32, #tpu.memory_space<vmem>>, vector<16x32xf32>
    tpu.vector_store %arg8[%c0_17, %c0_18], %56 {strides = array<i32>} : memref<16x32xf32, #tpu.memory_space<vmem>>, vector<16x32xf32>,
    return
  }
  func.func @transform_0(%arg0: i32) -> (i32, i32) {
    %c0_i32 = arith.constant 0 : i32
    %c0_i32_0 = arith.constant 0 : i32
    return %arg0, %c0_i32 : i32, i32
  }
  func.func @transform_1(%arg0: i32) -> (i32, i32) {
    %c0_i32 = arith.constant 0 : i32
    %c0_i32_0 = arith.constant 0 : i32
    return %arg0, %c0_i32 : i32, i32
  }
  func.func @transform_2(%arg0: i32) -> (i32, i32) {
    %c0_i32 = arith.constant 0 : i32
    %c0_i32_0 = arith.constant 0 : i32
    return %arg0, %c0_i32 : i32, i32
  }
  func.func @transform_3(%arg0: i32) -> (i32, i32) {
    %c0_i32 = arith.constant 0 : i32
    %c0_i32_0 = arith.constant 0 : i32
    return %arg0, %c0_i32 : i32, i32
  }
  func.func @transform_4(%arg0: i32) -> (i32, i32) {
    %c0_i32 = arith.constant 0 : i32
    %c0_i32_0 = arith.constant 0 : i32
    %c0_i32_1 = arith.constant 0 : i32
    return %c0_i32, %c0_i32_0 : i32, i32
  }
  func.func @transform_5(%arg0: i32) -> (i32, i32) {
    %c0_i32 = arith.constant 0 : i32
    %c0_i32_0 = arith.constant 0 : i32
    %c0_i32_1 = arith.constant 0 : i32
    return %c0_i32, %c0_i32_0 : i32, i32
  }
  func.func @transform_6(%arg0: i32) -> (i32, i32) {
    %c0_i32 = arith.constant 0 : i32
    %c0_i32_0 = arith.constant 0 : i32
    %c0_i32_1 = arith.constant 0 : i32
    return %c0_i32, %c0_i32_0 : i32, i32
  }
  func.func @transform_7(%arg0: i32) -> (i32, i32) {
    %c0_i32 = arith.constant 0 : i32
    %c0_i32_0 = arith.constant 0 : i32
    return %arg0, %c0_i32 : i32, i32
  }
}

</mosaic_0001>

<llo_original>
// kernel: tpu_custom_call.1
$region0: #{tpu_custom_call.1}
  #allocation0 [shape = 'u32[]', space=smem, size = 0x4, offset = 0x4, fixed_abs, tag = 'smem constant byte address 0x4 - core index']
  #allocation1 [shape = 'u32[144,128]{1,0:T(1,128)}', space=vmem, size = 0x12000, scoped, tag = 'internal scratch']
  %s0 = inlined_call_operand.hbm [shape: f32[16,32], index: 0, kind: input, shape index: {}]
  %s1 = inlined_call_operand.hbm [shape: f32[16,32], index: 1, kind: input, shape index: {}]
  %s2 = inlined_call_operand.hbm [shape: f32[16,32], index: 2, kind: input, shape index: {}]
  %s3 = inlined_call_operand.hbm [shape: f32[16,32], index: 3, kind: input, shape index: {}]
  %s4 = inlined_call_operand.vmem [shape: f32[1,32], index: 4, kind: input, shape index: {}]
  %s5 = inlined_call_operand.vmem [shape: bf16[32,32], index: 5, kind: input, shape index: {}]
  %s6 = inlined_call_operand.vmem [shape: f32[1,32], index: 6, kind: input, shape index: {}]
  %s7 = inlined_call_operand.hbm [shape: f32[16,32], index: 7, kind: output, shape index: {}]
  %s8 = sld [smem:[#allocation0]]
  $region54: #{tpu_custom_call.1} parent=0
    _
  %s10 = ssub.s32 1, %s8
  %s11 = scalar_select 0, %s10, %s8
  $region1: #{tpu_custom_call.1} parent=0
    #allocation2 [shape = 'u8[8192]{0}', space=vmem, size = 0x2000, scoped, tag = 'input window, operand 0, single buffered']
    #allocation3 [shape = 's32[1]{0}', space=sflag, size = 0x4, scoped, tag = 'scoped memory for tpu_custom_call.1']
    #allocation4 [shape = 's32[1]{0}', space=sflag, size = 0x4, scoped, tag = 'scoped memory for tpu_custom_call.1']
    #allocation5 [shape = 'u8[8192]{0}', space=vmem, size = 0x2000, scoped, tag = 'input window, operand 1, single buffered']
    #allocation6 [shape = 's32[1]{0}', space=sflag, size = 0x4, scoped, tag = 'scoped memory for tpu_custom_call.1']
    #allocation7 [shape = 'u8[8192]{0}', space=vmem, size = 0x2000, scoped, tag = 'input window, operand 2, single buffered']
    #allocation8 [shape = 'u8[8192]{0}', space=vmem, size = 0x2000, scoped, tag = 'input window, operand 3, single buffered']
    #allocation9 [shape = 's32[1]{0}', space=sflag, size = 0x4, scoped, tag = 'scoped memory for tpu_custom_call.1']
    #allocation10 [shape = 'u8[8192]{0}', space=vmem, size = 0x2000, scoped, tag = 'output window, operand 0, single buffered']
    %12 = vsyncpa [#allocation3], 0
    %13 = vsyncpa [#allocation6], 0
    %14 = vsyncpa [#allocation9], 0
    %15 = vsyncpa [#allocation4], 0
    // Predicated region
    $region2: #{tpu_custom_call.1} parent=1 // pred_check
      _
    $region3: #{tpu_custom_call.1} parent=1 // pred_check_branch
      %17 = sbr.rel (0) target = $region5
    $region4: #{tpu_custom_call.1} parent=1 // pred_region
      %s19 = ssub.s32 256, 256
      %20 = vsyncadd [#allocation3], %s19
      %s21 = sshll.u32 [#allocation2], 4
      %s22 = int_to_ptr.vmem [resolvable:$true] %s21
      %27 = dma.hbm_to_vmem [thread:$0]  %s0, 256, %s22, [#allocation3], 128, 128, 8
    $region5: #{tpu_custom_call.1} parent=1 // pred_fallthru
      _
    // Predicated region
    $region6: #{tpu_custom_call.1} parent=1 // pred_check
      _
    $region7: #{tpu_custom_call.1} parent=1 // pred_check_branch
      %29 = sbr.rel (0) target = $region9
    $region8: #{tpu_custom_call.1} parent=1 // pred_region
      %s31 = ssub.s32 256, 256
      %32 = vsyncadd [#allocation6], %s31
      %s33 = sshll.u32 [#allocation5], 4
      %s34 = int_to_ptr.vmem [resolvable:$true] %s33
      %39 = dma.hbm_to_vmem [thread:$0]  %s1, 256, %s34, [#allocation6], 128, 128, 8
    $region9: #{tpu_custom_call.1} parent=1 // pred_fallthru
      _
    // Predicated region
    $region10: #{tpu_custom_call.1} parent=1 // pred_check
      _
    $region11: #{tpu_custom_call.1} parent=1 // pred_check_branch
      %41 = sbr.rel (0) target = $region13
    $region12: #{tpu_custom_call.1} parent=1 // pred_region
      %s43 = ssub.s32 256, 256
      %44 = vsyncadd [#allocation6], %s43
      %s45 = sshll.u32 [#allocation7], 4
      %s46 = int_to_ptr.vmem [resolvable:$true] %s45
      %51 = dma.hbm_to_vmem [thread:$0]  %s2, 256, %s46, [#allocation6], 128, 128, 8
    $region13: #{tpu_custom_call.1} parent=1 // pred_fallthru
      _
    // Predicated region
    $region14: #{tpu_custom_call.1} parent=1 // pred_check
      _
    $region15: #{tpu_custom_call.1} parent=1 // pred_check_branch
      %53 = sbr.rel (0) target = $region17
    $region16: #{tpu_custom_call.1} parent=1 // pred_region
      %s55 = ssub.s32 256, 256
      %56 = vsyncadd [#allocation9], %s55
      %s57 = sshll.u32 [#allocation8], 4
      %s58 = int_to_ptr.vmem [resolvable:$true] %s57
      %63 = dma.hbm_to_vmem [thread:$0]  %s3, 256, %s58, [#allocation9], 128, 128, 8
    $region17: #{tpu_custom_call.1} parent=1 // pred_fallthru
      _
    // Predicated region
    $region18: #{tpu_custom_call.1} parent=1 // pred_check
      _
    $region19: #{tpu_custom_call.1} parent=1 // pred_check_branch
      %65 = sbr.rel (0) target = $region21
    $region20: #{tpu_custom_call.1} parent=1 // pred_region
      _
    $region21: #{tpu_custom_call.1} parent=1 // pred_fallthru
      _
    // Predicated region
    $region22: #{tpu_custom_call.1} parent=1 // pred_check
      _
    $region23: #{tpu_custom_call.1} parent=1 // pred_check_branch
      %67 = sbr.rel (0) target = $region25
    $region24: #{tpu_custom_call.1} parent=1 // pred_region
      _
    $region25: #{tpu_custom_call.1} parent=1 // pred_fallthru
      _
    // Predicated region
    $region26: #{tpu_custom_call.1} parent=1 // pred_check
      _
    $region27: #{tpu_custom_call.1} parent=1 // pred_check_branch
      %69 = sbr.rel (0) target = $region29
    $region28: #{tpu_custom_call.1} parent=1 // pred_region
      _
    $region29: #{tpu_custom_call.1} parent=1 // pred_fallthru
      _
    // Predicated region
    $region30: #{tpu_custom_call.1} parent=1 // pred_check
      _
    $region31: #{tpu_custom_call.1} parent=1 // pred_check_branch
      %71 = sbr.rel (0) target = $region33
    $region32: #{tpu_custom_call.1} parent=1 // pred_region
      %72 = dma.done [#allocation3], 256
    $region33: #{tpu_custom_call.1} parent=1 // pred_fallthru
      _
    // Predicated region
    $region34: #{tpu_custom_call.1} parent=1 // pred_check
      _
    $region35: #{tpu_custom_call.1} parent=1 // pred_check_branch
      %74 = sbr.rel (0) target = $region37
    $region36: #{tpu_custom_call.1} parent=1 // pred_region
      %75 = dma.done [#allocation6], 256
    $region37: #{tpu_custom_call.1} parent=1 // pred_fallthru
      _
    // Predicated region
    $region38: #{tpu_custom_call.1} parent=1 // pred_check
      _
    $region39: #{tpu_custom_call.1} parent=1 // pred_check_branch
      %77 = sbr.rel (0) target = $region41
    $region40: #{tpu_custom_call.1} parent=1 // pred_region
      %78 = dma.done [#allocation6], 256
    $region41: #{tpu_custom_call.1} parent=1 // pred_fallthru
      _
    // Predicated region
    $region42: #{tpu_custom_call.1} parent=1 // pred_check
      _
    $region43: #{tpu_custom_call.1} parent=1 // pred_check_branch
      %80 = sbr.rel (0) target = $region45
    $region44: #{tpu_custom_call.1} parent=1 // pred_region
      %81 = dma.done [#allocation9], 256
    $region45: #{tpu_custom_call.1} parent=1 // pred_fallthru
      _
    %v83 = vld [vmem:[%s4] sm:$0x1]
    %v84 = vld [vmem:[#allocation2] sm:$0xff]
    %v85 = vld [vmem:[#allocation2 + $0x8] sm:$0xff]
    %v86 = vld [vmem:[#allocation5] sm:$0xff]
    %v87 = vld [vmem:[#allocation5 + $0x8] sm:$0xff]
    %v88 = vld [vmem:[#allocation7] sm:$0xff]
    %v89 = vld [vmem:[#allocation7 + $0x8] sm:$0xff]
    %v90 = vld [vmem:[#allocation8] sm:$0xff]
    %v91 = vld [vmem:[#allocation8 + $0x8] sm:$0xff]
    %v93 = vlaneseq
    %v94 = vshrl.u32 %v93, 7
    %v95 = vsub.s32 0, %v94
    %v96 = vrot.slane %v83, %v95
    %v98 = vmul.f32 %v84, %v96
    %v99 = vmul.f32 %v85, %v96
    %vm100 = vcmask 261120
    %v101 = vsel %vm100, %v98, 0.0
    %102 = vadd.xlane.f32.xlu0 %v101
    %v103 = vpop.xlane.xlu0 %102
    %v104 = vsel %vm100, %v99, 0.0
    %105 = vadd.xlane.f32.xlu0 %v104
    %v106 = vpop.xlane.xlu0 %105
    %v107 = vmul.f32 %v86, %v96
    %v108 = vmul.f32 %v87, %v96
    %v109 = vsel %vm100, %v107, 0.0
    %110 = vadd.xlane.f32.xlu0 %v109
    %v111 = vpop.xlane.xlu0 %110
    %v112 = vsel %vm100, %v108, 0.0
    %113 = vadd.xlane.f32.xlu0 %v112
    %v114 = vpop.xlane.xlu0 %113
    %v115 = vmul.f32 %v88, %v96
    %v116 = vmul.f32 %v89, %v96
    %v117 = vsel %vm100, %v115, 0.0
    %118 = vadd.xlane.f32.xlu0 %v117
    %v119 = vpop.xlane.xlu0 %118
    %v120 = vsel %vm100, %v116, 0.0
    %121 = vadd.xlane.f32.xlu0 %v120
    %v122 = vpop.xlane.xlu0 %121
    %v123 = vmul.f32 %v90, %v96
    %v124 = vmul.f32 %v91, %v96
    %v125 = vsel %vm100, %v123, 0.0
    %126 = vadd.xlane.f32.xlu0 %v125
    %v127 = vpop.xlane.xlu0 %126
    %v128 = vsel %vm100, %v124, 0.0
    %129 = vadd.xlane.f32.xlu0 %v128
    %v130 = vpop.xlane.xlu0 %129
    %v131 = vmax.f32 %v103, %v111
    %v132 = vmax.f32 %v106, %v114
    %v133 = vmax.f32 %v131, %v119
    %v134 = vmax.f32 %v132, %v122
    %v135 = vmax.f32 %v133, %v127
    %v136 = vmax.f32 %v134, %v130
    %v137 = vsub.f32 %v103, %v135
    %v138 = vsub.f32 %v106, %v136
    %v139 = vmul.f32 %v137, 1.442695
    %v140 = vpow.pop %v139
    %v141 = vmul.f32 %v138, 1.442695
    %v142 = vpow.pop %v141
    %v143 = vsub.f32 %v111, %v135
    %v144 = vsub.f32 %v114, %v136
    %v145 = vmul.f32 %v143, 1.442695
    %v146 = vpow.pop %v145
    %v147 = vmul.f32 %v144, 1.442695
    %v148 = vpow.pop %v147
    %v149 = vsub.f32 %v119, %v135
    %v150 = vsub.f32 %v122, %v136
    %v151 = vmul.f32 %v149, 1.442695
    %v152 = vpow.pop %v151
    %v153 = vmul.f32 %v150, 1.442695
    %v154 = vpow.pop %v153
    %v155 = vsub.f32 %v127, %v135
    %v156 = vsub.f32 %v130, %v136
    %v157 = vmul.f32 %v155, 1.442695
    %v158 = vpow.pop %v157
    %v159 = vmul.f32 %v156, 1.442695
    %v160 = vpow.pop %v159
    %v161 = vadd.f32 %v140, %v146
    %v162 = vadd.f32 %v142, %v148
    %v163 = vadd.f32 %v161, %v152
    %v164 = vadd.f32 %v162, %v154
    %v165 = vadd.f32 %v163, %v158
    %v166 = vadd.f32 %v164, %v160
    %v167 = vrcp.pop %v165
    %v168 = vrcp.pop %v166
    %v169 = vmul.f32 %v140, %v167
    %v170 = vmul.f32 %v142, %v168
    %v171 = vmul.f32 %v169, %v84
    %v172 = vmul.f32 %v170, %v85
    %v173 = vmul.f32 %v146, %v167
    %v174 = vmul.f32 %v148, %v168
    %v175 = vmul.f32 %v173, %v86
    %v176 = vmul.f32 %v174, %v87
    %v177 = vadd.f32 %v171, %v175
    %v178 = vadd.f32 %v172, %v176
    %v179 = vmul.f32 %v152, %v167
    %v180 = vmul.f32 %v154, %v168
    %v181 = vmul.f32 %v179, %v88
    %v182 = vmul.f32 %v180, %v89
    %v183 = vadd.f32 %v177, %v181
    %v184 = vadd.f32 %v178, %v182
    %v185 = vmul.f32 %v158, %v167
    %v186 = vmul.f32 %v160, %v168
    %v187 = vmul.f32 %v185, %v90
    %v188 = vmul.f32 %v186, %v91
    %v189 = vadd.f32 %v183, %v187
    %v190 = vadd.f32 %v184, %v188
    %v191 = vpack.c.bf16 %v190, %v189
    %v192 = vld [vmem:[%s5] sm:$0xf]
    %v193 = vld [vmem:[%s5 + $0x4] sm:$0xf]
    %v194 = vld [vmem:[%s5 + $0x8] sm:$0xf]
    %v195 = vld [vmem:[%s5 + $0xc] sm:$0xf]
    %v196 = vld [vmem:[%s6] sm:$0x1]
    %v198 = vlaneseq
    %v199 = vshrl.u32 %v198, 7
    %v200 = vsub.s32 0, %v199
    %v201 = vrot.slane %v196, %v200
    %v207 = vunpack.c.l.b16 %v192
    %v208 = vunpack.c.l.b16 %v193
    %v209 = vunpack.c.l.b16 %v194
    %v210 = vunpack.c.l.b16 %v195
    %v211 = vpack.c.b16 %v208, %v207
    %v212 = vpack.c.b16 %v210, %v209
    %v216 = vsel %vm100, %v191, 0
    %218 = vmatprep.subr.bf16.mxu0 0
    %219 = vmatpush1.bf16.msra.mxu0 %v211
    %220 = vmatprep.subr.bf16.mxu0 0
    %221 = vmatpush1.bf16.msra.mxu0 %v212
    %222 = vmatprep.subr.bf16.mxu0 0
    %223 = vmatpush1.bf16.msra.mxu0 0
    %224 = vmatprep.subr.bf16.mxu0 0
    %225 = vmatpush1.bf16.msra.mxu0 0
    %226 = vmatprep.subr.bf16.mxu0 0
    %227 = vmatpush1.bf16.msra.mxu0 0
    %228 = vmatprep.subr.bf16.mxu0 0
    %229 = vmatpush1.bf16.msra.mxu0 0
    %230 = vmatprep.subr.bf16.mxu0 0
    %231 = vmatpush1.bf16.msra.mxu0 0
    %232 = vmatprep.subr.bf16.mxu0 0
    %233 = vmatpush1.bf16.msra.mxu0 0
    %234 = vmatprep.subr.bf16.mxu0 0
    %235 = vmatpush1.bf16.msra.mxu0 0
    %236 = vmatprep.subr.bf16.mxu0 0
    %237 = vmatpush1.bf16.msra.mxu0 0
    %238 = vmatprep.subr.bf16.mxu0 0
    %239 = vmatpush1.bf16.msra.mxu0 0
    %240 = vmatprep.subr.bf16.mxu0 0
    %241 = vmatpush1.bf16.msra.mxu0 0
    %242 = vmatprep.subr.bf16.mxu0 0
    %243 = vmatpush1.bf16.msra.mxu0 0
    %244 = vmatprep.subr.bf16.mxu0 0
    %245 = vmatpush1.bf16.msra.mxu0 0
    %246 = vmatprep.subr.bf16.mxu0 0
    %247 = vmatpush1.bf16.msra.mxu0 0
    %248 = vmatprep.subr.bf16.mxu0 0
    %249 = vmatpush1.bf16.msra.mxu0 0
    %250 = vmatprep.mubr.bf16.mxu0 0
    %251 = vmatmul.mubr.bf16.gmra.mrb[0].mxu0 %v216
    %v252 = vpop.f32.mrb[0].mxu0
    %v253 = vadd.f32 %v201, %v252
    %v254 = vpop.f32.mrb[0].mxu0
    %v255 = vpop.f32.mrb[0].mxu0
    %v256 = vadd.f32 %v201, %v255
    %v257 = vpop.f32.mrb[0].mxu0
    %258 = vdwg.mxu0
    %259 = vst.msk [vmem:[#allocation10] sm:$0xff] %vm100, %v253
    %260 = vst.msk [vmem:[#allocation10 + $0x8] sm:$0xff] %vm100, %v256
    // Predicated region
    $region46: #{tpu_custom_call.1} parent=1 // pred_check
      _
    $region47: #{tpu_custom_call.1} parent=1 // pred_check_branch
      %262 = sbr.rel (0) target = $region49
    $region48: #{tpu_custom_call.1} parent=1 // pred_region
      %s264 = ssub.s32 256, 256
      %265 = vsyncadd [#allocation4], %s264
      %s266 = sshll.u32 [#allocation10], 4
      %s267 = int_to_ptr.vmem [resolvable:$true] %s266
      %272 = dma.vmem_to_hbm [thread:$0]  %s267, 256, %s7, [#allocation4], 128, 128, 8
    $region49: #{tpu_custom_call.1} parent=1 // pred_fallthru
      _
    // Predicated region
    $region50: #{tpu_custom_call.1} parent=1 // pred_check
      _
    $region51: #{tpu_custom_call.1} parent=1 // pred_check_branch
      %274 = sbr.rel (0) target = $region53
    $region52: #{tpu_custom_call.1} parent=1 // pred_region
      %275 = dma.done [#allocation4], 256
    $region53: #{tpu_custom_call.1} parent=1 // pred_fallthru
      _
    %276 = vsyncpa [#allocation3], 1
    %277 = vsyncpa [#allocation6], 1
    %278 = vsyncpa [#allocation9], 1
    %279 = vsyncpa [#allocation4], 1

</llo_original>
